<compile_context>
chip_gen: v7x
topology: tpu7x:2x2x1
jax: 0.10.0
libtpu: 0.0.40
codegen_flags: <defaults>
</compile_context>

<pallas_src>
import jax
import jax.numpy as jnp
from jax.experimental import pallas as pl
from jax.experimental.pallas import tpu as pltpu


def _round_up(n, m):
    return ((n + m - 1) // m) * m


def _mlp_kernel(h_ref, e_ref, w1h_ref, w1e_ref, b12_ref, w2_ref, w3_ref, b3_ref,
                o_ref):
    # bf16 operands for the MXU; f32 accumulation; f32 elementwise path.
    h = h_ref[...].astype(jnp.bfloat16)
    e = e_ref[...].astype(jnp.bfloat16)

    # Layer 1: concat(h, e) @ W1 realized as a split matmul (no concat copy).
    x = (jnp.dot(h, w1h_ref[...], preferred_element_type=jnp.float32)
         + jnp.dot(e, w1e_ref[...], preferred_element_type=jnp.float32)
         + b12_ref[0:1, :])
    x = jnp.maximum(x, 0.0)

    # Layer 2
    x = (jnp.dot(x.astype(jnp.bfloat16), w2_ref[...],
                 preferred_element_type=jnp.float32)
         + b12_ref[1:2, :])
    x = jnp.maximum(x, 0.0)

    # Layer 3 (no activation). Output lane dim is padded to a multiple of 128,
    # so this store is an unmasked, lane-dense vst.
    x = (jnp.dot(x.astype(jnp.bfloat16), w3_ref[...],
                 preferred_element_type=jnp.float32)
         + b3_ref[...])
    o_ref[...] = x.astype(o_ref.dtype)


def init_params(key, det_state, embedded_size, hidden_size=None):
    """Raw f32 params matching the PyTorch module (W stored as (in, out))."""
    if hidden_size is None:
        hidden_size = det_state
    input_size = det_state + embedded_size
    ks = jax.random.split(key, 6)

    def lin(kw, kb, fan_in, fan_out):
        bound = 1.0 / jnp.sqrt(fan_in)
        w = jax.random.uniform(kw, (fan_in, fan_out), jnp.float32, -bound, bound)
        b = jax.random.uniform(kb, (1, fan_out), jnp.float32, -bound, bound)
        return w, b

    w1, b1 = lin(ks[0], ks[1], input_size, hidden_size)
    w2, b2 = lin(ks[2], ks[3], hidden_size, hidden_size)
    w3, b3 = lin(ks[4], ks[5], hidden_size, det_state)
    return {"w1": w1, "b1": b1, "w2": w2, "b2": b2, "w3": w3, "b3": b3}


def prepare_kernel_params(params, det_state):
    """One-time transform of raw f32 params into kernel layout:
       split w1, zero-pad lane dims to multiples of 128, cast weights to bf16,
       and pack b1/b2 into one (2, hid_pad) f32 array."""
    w1, b1 = params["w1"], params["b1"]
    w2, b2 = params["w2"], params["b2"]
    w3, b3 = params["w3"], params["b3"]
    in_size, hid = w1.shape
    assert w2.shape == (hid, hid)
    assert det_state <= in_size, "det_state must not exceed w1 fan-in"
    det_out = w3.shape[1]
    hid_p = _round_up(hid, 128)
    det_p = _round_up(det_out, 128)

    def pad2(w, rows, cols):
        return jnp.pad(w, ((0, rows - w.shape[0]), (0, cols - w.shape[1])))

    return {
        "w1h": pad2(w1[:det_state, :], det_state, hid_p).astype(jnp.bfloat16),
        "w1e": pad2(w1[det_state:, :], in_size - det_state, hid_p).astype(jnp.bfloat16),
        "b12": jnp.concatenate(
            [pad2(b1.reshape(1, -1), 1, hid_p),
             pad2(b2.reshape(1, -1), 1, hid_p)], axis=0).astype(jnp.float32),
        "w2": pad2(w2, hid_p, hid_p).astype(jnp.bfloat16),
        "w3": pad2(w3, hid_p, det_p).astype(jnp.bfloat16),
        "b3": pad2(b3.reshape(1, -1), 1, det_p).astype(jnp.float32),
        "det_out": det_out,
    }


def deterministic_posterior(hidden_state, embedded, kp, *, batch_tile=None):
    B, det_in = hidden_state.shape
    _, emb = embedded.shape
    assert kp["w1h"].shape[0] == det_in, "hidden_state width must equal det_state"
    assert kp["w1e"].shape[0] == emb, "embedded width mismatch"
    hid_p = kp["w2"].shape[0]
    det_p = kp["w3"].shape[1]
    det_out = kp["det_out"]

    # Batch tile: big tiles amortize the ~0.35us/step overhead. A 1024-row
    # tile keeps double-buffered activations << the 32 MiB default scoped
    # VMEM (and far below v7x's 64 MiB physical), so no vmem_limit override
    # is needed here.
    if batch_tile is None:
        batch_tile = B if B <= 1024 else 1024
    tb = batch_tile
    assert tb == B or tb % 8 == 0, "batch tile must be the full batch or a multiple of 8"
    grid = (pl.cdiv(B, tb),)

    row_spec = lambda shape: pl.BlockSpec(shape, lambda i: (i, 0))
    const_spec = lambda shape: pl.BlockSpec(shape, lambda i: (0, 0))

    out_padded = pl.pallas_call(
        _mlp_kernel,
        out_shape=jax.ShapeDtypeStruct((B, det_p), hidden_state.dtype),
        grid=grid,
        in_specs=[
            row_spec((tb, det_in)),        # hidden_state tile
            row_spec((tb, emb)),           # embedded tile
            const_spec((det_in, hid_p)),   # w1_h (VMEM-resident across steps)
            const_spec((emb, hid_p)),      # w1_e
            const_spec((2, hid_p)),        # b1/b2 packed
            const_spec((hid_p, hid_p)),    # w2
            const_spec((hid_p, det_p)),    # w3
            const_spec((1, det_p)),        # b3
        ],
        out_specs=row_spec((tb, det_p)),
        compiler_params=pltpu.CompilerParams(
            dimension_semantics=("parallel",)),  # shard batch grid on v7x's 2 TCs
    )(hidden_state, embedded, kp["w1h"], kp["w1e"], kp["b12"],
      kp["w2"], kp["w3"], kp["b3"])

    # Kernel writes a lane-dense (B, det_p) slab; slice to the logical width.
    return out_padded[:, :det_out]


def reference_f32(h, e, p):
    x = jnp.concatenate([h, e], axis=1)
    x = jnp.maximum(x @ p["w1"] + p["b1"], 0.0)
    x = jnp.maximum(x @ p["w2"] + p["b2"], 0.0)
    return x @ p["w3"] + p["b3"]


def reference_bf16(h, e, p):
    # Mirrors the kernel numerics: bf16 matmul inputs, f32 accumulation,
    # f32 bias add / ReLU.
    def dot(a, w):
        return jnp.dot(a.astype(jnp.bfloat16), w.astype(jnp.bfloat16),
                       preferred_element_type=jnp.float32)
    x = jnp.concatenate([h, e], axis=1)
    x = jnp.maximum(dot(x, p["w1"]) + p["b1"], 0.0)
    x = jnp.maximum(dot(x, p["w2"]) + p["b2"], 0.0)
    return dot(x, p["w3"]) + p["b3"]


if __name__ == "__main__":
    det_state = 32        # state_size['det_state']
    embedded_size = 16
    hidden_size = det_state  # default in the module

    key = jax.random.PRNGKey(0)
    k_h, k_e, k_p, k_h2, k_e2 = jax.random.split(key, 5)
    params = init_params(k_p, det_state, embedded_size, hidden_size)
    kparams = prepare_kernel_params(params, det_state)   # one-time prep

    # Small shapes consistent with the module.
    batch = 2
    hidden_state = jax.random.normal(k_h, (batch, det_state), jnp.float32)
    embedded = jax.random.normal(k_e, (batch, embedded_size), jnp.float32)

    out = jax.block_until_ready(
        deterministic_posterior(hidden_state, embedded, kparams))
    assert out.shape == (batch, det_state)
    assert jnp.allclose(out, reference_bf16(hidden_state, embedded, params),
                        atol=1e-3, rtol=1e-3)
    assert jnp.allclose(out, reference_f32(hidden_state, embedded, params),
                        atol=5e-2, rtol=1e-1)

    # Larger batch exercising the pipelined batch grid (3 tiles of 64 rows).
    batch2 = 192
    h2 = jax.random.normal(k_h2, (batch2, det_state), jnp.float32)
    e2 = jax.random.normal(k_e2, (batch2, embedded_size), jnp.float32)
    out2 = jax.block_until_ready(
        deterministic_posterior(h2, e2, kparams, batch_tile=64))
    assert out2.shape == (batch2, det_state)
    assert jnp.allclose(out2, reference_bf16(h2, e2, params),
                        atol=1e-3, rtol=1e-3)

    print("KERNEL_OK")
</pallas_src>

<mosaic_0001>
module attributes {stable_mosaic.version = 11 : i64} {
  func.func @_mlp_kernel(%arg0: i32, %arg1: memref<2x32xf32, #tpu.memory_space<vmem>>, %arg2: memref<2x16xf32, #tpu.memory_space<vmem>>, %arg3: memref<32x128xbf16, #tpu.memory_space<vmem>>, %arg4: memref<16x128xbf16, #tpu.memory_space<vmem>>, %arg5: memref<2x128xf32, #tpu.memory_space<vmem>>, %arg6: memref<128x128xbf16, #tpu.memory_space<vmem>>, %arg7: memref<128x128xbf16, #tpu.memory_space<vmem>>, %arg8: memref<1x128xf32, #tpu.memory_space<vmem>>, %arg9: memref<2x128xf32, #tpu.memory_space<vmem>>) attributes {dimension_semantics = [#tpu.dimension_semantics<parallel>], iteration_bounds = array<i64: 1>, scalar_prefetch = 0 : i64, scratch_operands = 0 : i64, tpu.core_type = #tpu.core_type<tc>, window_params = [{transform_indices = @transform_0, window_bounds = array<i64: 2, 32>}, {transform_indices = @transform_1, window_bounds = array<i64: 2, 16>}, {pipeline_mode = #tpu.pipeline_mode<synchronous>, transform_indices = @transform_2, window_bounds = array<i64: 32, 128>}, {pipeline_mode = #tpu.pipeline_mode<synchronous>, transform_indices = @transform_3, window_bounds = array<i64: 16, 128>}, {pipeline_mode = #tpu.pipeline_mode<synchronous>, transform_indices = @transform_4, window_bounds = array<i64: 2, 128>}, {pipeline_mode = #tpu.pipeline_mode<synchronous>, transform_indices = @transform_5, window_bounds = array<i64: 128, 128>}, {pipeline_mode = #tpu.pipeline_mode<synchronous>, transform_indices = @transform_6, window_bounds = array<i64: 128, 128>}, {pipeline_mode = #tpu.pipeline_mode<synchronous>, transform_indices = @transform_7, window_bounds = array<i64: 1, 128>}, {transform_indices = @transform_8, window_bounds = array<i64: 2, 128>}]} {
    %c0 = arith.constant 0 : index
    %c0_0 = arith.constant 0 : index
    %0 = vector.load %arg1[%c0, %c0_0] : memref<2x32xf32, #tpu.memory_space<vmem>>, vector<2x32xf32>
    %1 = arith.truncf %0 : vector<2x32xf32> to vector<2x32xbf16>
    %c0_1 = arith.constant 0 : index
    %c0_2 = arith.constant 0 : index
    %2 = vector.load %arg2[%c0_1, %c0_2] : memref<2x16xf32, #tpu.memory_space<vmem>>, vector<2x16xf32>
    %3 = arith.truncf %2 : vector<2x16xf32> to vector<2x16xbf16>
    %c0_3 = arith.constant 0 : index
    %c0_4 = arith.constant 0 : index
    %4 = vector.load %arg3[%c0_3, %c0_4] : memref<32x128xbf16, #tpu.memory_space<vmem>>, vector<32x128xbf16>
    %cst = arith.constant dense<0.000000e+00> : vector<2x128xf32>
    %5 = tpu.matmul %1, %4, %cst {dimension_numbers = #tpu.dot_dimension_numbers<[1], [0], [0], [1], [0, 0, 1, 1], [], []>} : vector<2x32xbf16>, vector<32x128xbf16>, vector<2x128xf32> -> vector<2x128xf32>
    %c0_5 = arith.constant 0 : index
    %c0_6 = arith.constant 0 : index
    %6 = vector.load %arg4[%c0_5, %c0_6] : memref<16x128xbf16, #tpu.memory_space<vmem>>, vector<16x128xbf16>
    %cst_7 = arith.constant dense<0.000000e+00> : vector<2x128xf32>
    %7 = tpu.matmul %3, %6, %cst_7 {dimension_numbers = #tpu.dot_dimension_numbers<[1], [0], [0], [1], [0, 0, 1, 1], [], []>} : vector<2x16xbf16>, vector<16x128xbf16>, vector<2x128xf32> -> vector<2x128xf32>
    %8 = arith.addf %5, %7 : vector<2x128xf32>
    %c0_8 = arith.constant 0 : index
    %c0_9 = arith.constant 0 : index
    %9 = vector.load %arg5[%c0_8, %c0_9] : memref<2x128xf32, #tpu.memory_space<vmem>>, vector<1x128xf32>
    %10 = vector.broadcast %9 : vector<1x128xf32> to vector<2x128xf32>
    %11 = arith.addf %8, %10 : vector<2x128xf32>
    %cst_10 = arith.constant 0.000000e+00 : f32
    %12 = vector.broadcast %cst_10 : f32 to vector<2x128xf32>
    %13 = arith.maximumf %11, %12 : vector<2x128xf32>
    %14 = arith.truncf %13 : vector<2x128xf32> to vector<2x128xbf16>
    %c0_11 = arith.constant 0 : index
    %c0_12 = arith.constant 0 : index
    %15 = vector.load %arg6[%c0_11, %c0_12] : memref<128x128xbf16, #tpu.memory_space<vmem>>, vector<128x128xbf16>
    %cst_13 = arith.constant dense<0.000000e+00> : vector<2x128xf32>
    %16 = tpu.matmul %14, %15, %cst_13 {dimension_numbers = #tpu.dot_dimension_numbers<[1], [0], [0], [1], [0, 0, 1, 1], [], []>} : vector<2x128xbf16>, vector<128x128xbf16>, vector<2x128xf32> -> vector<2x128xf32>
    %c1 = arith.constant 1 : index
    %c0_14 = arith.constant 0 : index
    %17 = vector.load %arg5[%c1, %c0_14] : memref<2x128xf32, #tpu.memory_space<vmem>>, vector<1x128xf32>
    %18 = vector.broadcast %17 : vector<1x128xf32> to vector<2x128xf32>
    %19 = arith.addf %16, %18 : vector<2x128xf32>
    %cst_15 = arith.constant 0.000000e+00 : f32
    %20 = vector.broadcast %cst_15 : f32 to vector<2x128xf32>
    %21 = arith.maximumf %19, %20 : vector<2x128xf32>
    %22 = arith.truncf %21 : vector<2x128xf32> to vector<2x128xbf16>
    %c0_16 = arith.constant 0 : index
    %c0_17 = arith.constant 0 : index
    %23 = vector.load %arg7[%c0_16, %c0_17] : memref<128x128xbf16, #tpu.memory_space<vmem>>, vector<128x128xbf16>
    %cst_18 = arith.constant dense<0.000000e+00> : vector<2x128xf32>
    %24 = tpu.matmul %22, %23, %cst_18 {dimension_numbers = #tpu.dot_dimension_numbers<[1], [0], [0], [1], [0, 0, 1, 1], [], []>} : vector<2x128xbf16>, vector<128x128xbf16>, vector<2x128xf32> -> vector<2x128xf32>
    %c0_19 = arith.constant 0 : index
    %c0_20 = arith.constant 0 : index
    %25 = vector.load %arg8[%c0_19, %c0_20] : memref<1x128xf32, #tpu.memory_space<vmem>>, vector<1x128xf32>
    %26 = vector.broadcast %25 : vector<1x128xf32> to vector<2x128xf32>
    %27 = arith.addf %24, %26 : vector<2x128xf32>
    %c0_21 = arith.constant 0 : index
    %c0_22 = arith.constant 0 : index
    %28 = vector.load %arg9[%c0_21, %c0_22] : memref<2x128xf32, #tpu.memory_space<vmem>>, vector<2x128xf32>
    tpu.vector_store %arg9[%c0_21, %c0_22], %27 {strides = array<i32>} : memref<2x128xf32, #tpu.memory_space<vmem>>, vector<2x128xf32>,
    return
  }
  func.func @transform_0(%arg0: i32) -> (i32, i32) {
    %c0_i32 = arith.constant 0 : i32
    %c0_i32_0 = arith.constant 0 : i32
    return %arg0, %c0_i32 : i32, i32
  }
  func.func @transform_1(%arg0: i32) -> (i32, i32) {
    %c0_i32 = arith.constant 0 : i32
    %c0_i32_0 = arith.constant 0 : i32
    return %arg0, %c0_i32 : i32, i32
  }
  func.func @transform_2(%arg0: i32) -> (i32, i32) {
    %c0_i32 = arith.constant 0 : i32
    %c0_i32_0 = arith.constant 0 : i32
    %c0_i32_1 = arith.constant 0 : i32
    return %c0_i32, %c0_i32_0 : i32, i32
  }
  func.func @transform_3(%arg0: i32) -> (i32, i32) {
    %c0_i32 = arith.constant 0 : i32
    %c0_i32_0 = arith.constant 0 : i32
    %c0_i32_1 = arith.constant 0 : i32
    return %c0_i32, %c0_i32_0 : i32, i32
  }
  func.func @transform_4(%arg0: i32) -> (i32, i32) {
    %c0_i32 = arith.constant 0 : i32
    %c0_i32_0 = arith.constant 0 : i32
    %c0_i32_1 = arith.constant 0 : i32
    return %c0_i32, %c0_i32_0 : i32, i32
  }
  func.func @transform_5(%arg0: i32) -> (i32, i32) {
    %c0_i32 = arith.constant 0 : i32
    %c0_i32_0 = arith.constant 0 : i32
    %c0_i32_1 = arith.constant 0 : i32
    return %c0_i32, %c0_i32_0 : i32, i32
  }
  func.func @transform_6(%arg0: i32) -> (i32, i32) {
    %c0_i32 = arith.constant 0 : i32
    %c0_i32_0 = arith.constant 0 : i32
    %c0_i32_1 = arith.constant 0 : i32
    return %c0_i32, %c0_i32_0 : i32, i32
  }
  func.func @transform_7(%arg0: i32) -> (i32, i32) {
    %c0_i32 = arith.constant 0 : i32
    %c0_i32_0 = arith.constant 0 : i32
    %c0_i32_1 = arith.constant 0 : i32
    return %c0_i32, %c0_i32_0 : i32, i32
  }
  func.func @transform_8(%arg0: i32) -> (i32, i32) {
    %c0_i32 = arith.constant 0 : i32
    %c0_i32_0 = arith.constant 0 : i32
    return %arg0, %c0_i32 : i32, i32
  }
}

</mosaic_0001>

<llo_original>
// kernel: tpu_custom_call.1
$region0: #{tpu_custom_call.1}
  #allocation0 [shape = 'u32[]', space=smem, size = 0x4, offset = 0x4, fixed_abs, tag = 'smem constant byte address 0x4 - core index']
  #allocation1 [shape = 'u32[144,128]{1,0:T(1,128)}', space=vmem, size = 0x12000, scoped, tag = 'internal scratch']
  %s0 = inlined_call_operand.hbm [shape: f32[2,32], index: 0, kind: input, shape index: {}]
  %s1 = inlined_call_operand.vmem [shape: f32[2,16], index: 1, kind: input, shape index: {}]
  %s2 = inlined_call_operand.hbm [shape: bf16[32,128], index: 2, kind: input, shape index: {}]
  %s3 = inlined_call_operand.vmem [shape: bf16[16,128], index: 3, kind: input, shape index: {}]
  %s4 = inlined_call_operand.vmem [shape: f32[2,128], index: 4, kind: input, shape index: {}]
  %s5 = inlined_call_operand.hbm [shape: bf16[128,128], index: 5, kind: input, shape index: {}]
  %s6 = inlined_call_operand.hbm [shape: bf16[128,128], index: 6, kind: input, shape index: {}]
  %s7 = inlined_call_operand.vmem [shape: f32[1,128], index: 7, kind: input, shape index: {}]
  %s8 = inlined_call_operand.hbm [shape: f32[2,128], index: 8, kind: output, shape index: {}]
  %s9 = sld [smem:[#allocation0]]
  $region58: #{tpu_custom_call.1} parent=0
    _
  %s11 = ssub.s32 1, %s9
  %s12 = scalar_select 0, %s11, %s9
  $region1: #{tpu_custom_call.1} parent=0
    #allocation2 [shape = 'u8[1024]{0}', space=vmem, size = 0x400, scoped, tag = 'input window, operand 0, single buffered']
    #allocation3 [shape = 's32[1]{0}', space=sflag, size = 0x4, scoped, tag = 'scoped memory for tpu_custom_call.1']
    #allocation4 [shape = 's32[1]{0}', space=sflag, size = 0x4, scoped, tag = 'scoped memory for tpu_custom_call.1']
    #allocation5 [shape = 'u8[8192]{0}', space=vmem, size = 0x2000, scoped, tag = 'input window, operand 2, single buffered']
    #allocation6 [shape = 's32[1]{0}', space=sflag, size = 0x4, scoped, tag = 'scoped memory for tpu_custom_call.1']
    #allocation7 [shape = 'u8[32768]{0}', space=vmem, size = 0x8000, scoped, tag = 'input window, operand 5, single buffered']
    #allocation8 [shape = 'u8[32768]{0}', space=vmem, size = 0x8000, scoped, tag = 'input window, operand 6, single buffered']
    #allocation9 [shape = 's32[1]{0}', space=sflag, size = 0x4, scoped, tag = 'scoped memory for tpu_custom_call.1']
    #allocation10 [shape = 'u8[1024]{0}', space=vmem, size = 0x400, scoped, tag = 'output window, operand 0, single buffered']
    %13 = vsyncpa [#allocation3], 0
    %14 = vsyncpa [#allocation6], 0
    %15 = vsyncpa [#allocation9], 0
    %16 = vsyncpa [#allocation4], 0
    // Predicated region
    $region2: #{tpu_custom_call.1} parent=1 // pred_check
      _
    $region3: #{tpu_custom_call.1} parent=1 // pred_check_branch
      %18 = sbr.rel (0) target = $region5
    $region4: #{tpu_custom_call.1} parent=1 // pred_region
      %s20 = ssub.s32 32, 32
      %21 = vsyncadd [#allocation3], %s20
      %s23 = sshll.u32 [#allocation2], 4
      %s24 = int_to_ptr.vmem [resolvable:$true] %s23
      %26 = dma.hbm_to_vmem [thread:$0]  %s0, 32, %s24, [#allocation3]
    $region5: #{tpu_custom_call.1} parent=1 // pred_fallthru
      _
    // Predicated region
    $region6: #{tpu_custom_call.1} parent=1 // pred_check
      _
    $region7: #{tpu_custom_call.1} parent=1 // pred_check_branch
      %28 = sbr.rel (0) target = $region9
    $region8: #{tpu_custom_call.1} parent=1 // pred_region
      _
    $region9: #{tpu_custom_call.1} parent=1 // pred_fallthru
      _
    // Predicated region
    $region10: #{tpu_custom_call.1} parent=1 // pred_check
      _
    $region11: #{tpu_custom_call.1} parent=1 // pred_check_branch
      %30 = sbr.rel (0) target = $region13
    $region12: #{tpu_custom_call.1} parent=1 // pred_region
      %s32 = ssub.s32 256, 256
      %33 = vsyncadd [#allocation6], %s32
      %s34 = sshll.u32 [#allocation5], 4
      %s35 = int_to_ptr.vmem [resolvable:$true] %s34
      %40 = dma.hbm_to_vmem [thread:$0]  %s2, 256, %s35, [#allocation6], 64, 64, 4
    $region13: #{tpu_custom_call.1} parent=1 // pred_fallthru
      _
    // Predicated region
    $region14: #{tpu_custom_call.1} parent=1 // pred_check
      _
    $region15: #{tpu_custom_call.1} parent=1 // pred_check_branch
      %42 = sbr.rel (0) target = $region17
    $region16: #{tpu_custom_call.1} parent=1 // pred_region
      _
    $region17: #{tpu_custom_call.1} parent=1 // pred_fallthru
      _
    // Predicated region
    $region18: #{tpu_custom_call.1} parent=1 // pred_check
      _
    $region19: #{tpu_custom_call.1} parent=1 // pred_check_branch
      %44 = sbr.rel (0) target = $region21
    $region20: #{tpu_custom_call.1} parent=1 // pred_region
      _
    $region21: #{tpu_custom_call.1} parent=1 // pred_fallthru
      _
    // Predicated region
    $region22: #{tpu_custom_call.1} parent=1 // pred_check
      _
    $region23: #{tpu_custom_call.1} parent=1 // pred_check_branch
      %46 = sbr.rel (0) target = $region25
    $region24: #{tpu_custom_call.1} parent=1 // pred_region
      %s48 = ssub.s32 1024, 1024
      %49 = vsyncadd [#allocation6], %s48
      %s50 = sshll.u32 [#allocation7], 4
      %s51 = int_to_ptr.vmem [resolvable:$true] %s50
      %56 = dma.hbm_to_vmem [thread:$0]  %s5, 1024, %s51, [#allocation6], 64, 64, 4
    $region25: #{tpu_custom_call.1} parent=1 // pred_fallthru
      _
    // Predicated region
    $region26: #{tpu_custom_call.1} parent=1 // pred_check
      _
    $region27: #{tpu_custom_call.1} parent=1 // pred_check_branch
      %58 = sbr.rel (0) target = $region29
    $region28: #{tpu_custom_call.1} parent=1 // pred_region
      %s60 = ssub.s32 1024, 1024
      %61 = vsyncadd [#allocation9], %s60
      %s62 = sshll.u32 [#allocation8], 4
      %s63 = int_to_ptr.vmem [resolvable:$true] %s62
      %68 = dma.hbm_to_vmem [thread:$0]  %s6, 1024, %s63, [#allocation9], 64, 64, 4
    $region29: #{tpu_custom_call.1} parent=1 // pred_fallthru
      _
    // Predicated region
    $region30: #{tpu_custom_call.1} parent=1 // pred_check
      _
    $region31: #{tpu_custom_call.1} parent=1 // pred_check_branch
      %70 = sbr.rel (0) target = $region33
    $region32: #{tpu_custom_call.1} parent=1 // pred_region
      _
    $region33: #{tpu_custom_call.1} parent=1 // pred_fallthru
      _
    // Predicated region
    $region34: #{tpu_custom_call.1} parent=1 // pred_check
      _
    $region35: #{tpu_custom_call.1} parent=1 // pred_check_branch
      %72 = sbr.rel (0) target = $region37
    $region36: #{tpu_custom_call.1} parent=1 // pred_region
      %73 = dma.done [#allocation3], 32
    $region37: #{tpu_custom_call.1} parent=1 // pred_fallthru
      _
    // Predicated region
    $region38: #{tpu_custom_call.1} parent=1 // pred_check
      _
    $region39: #{tpu_custom_call.1} parent=1 // pred_check_branch
      %75 = sbr.rel (0) target = $region41
    $region40: #{tpu_custom_call.1} parent=1 // pred_region
      %76 = dma.done [#allocation6], 256
    $region41: #{tpu_custom_call.1} parent=1 // pred_fallthru
      _
    // Predicated region
    $region42: #{tpu_custom_call.1} parent=1 // pred_check
      _
    $region43: #{tpu_custom_call.1} parent=1 // pred_check_branch
      %78 = sbr.rel (0) target = $region45
    $region44: #{tpu_custom_call.1} parent=1 // pred_region
      %79 = dma.done [#allocation6], 1024
    $region45: #{tpu_custom_call.1} parent=1 // pred_fallthru
      _
    // Predicated region
    $region46: #{tpu_custom_call.1} parent=1 // pred_check
      _
    $region47: #{tpu_custom_call.1} parent=1 // pred_check_branch
      %81 = sbr.rel (0) target = $region49
    $region48: #{tpu_custom_call.1} parent=1 // pred_region
      %82 = dma.done [#allocation9], 1024
    $region49: #{tpu_custom_call.1} parent=1 // pred_fallthru
      _
    %v84 = vld [vmem:[#allocation2] sm:$0x3]
    %v85 = vpack.c.bf16 %v84, %v84
    %v86 = vld [vmem:[%s1] sm:$0x3]
    %v87 = vpack.c.bf16 %v86, %v86
    %v88 = vld [vmem:[#allocation5] sm:$0xf]
    %v89 = vld [vmem:[#allocation5 + $0x4] sm:$0xf]
    %v90 = vld [vmem:[#allocation5 + $0x8] sm:$0xf]
    %v91 = vld [vmem:[#allocation5 + $0xc] sm:$0xf]
    %v92 = vld [vmem:[%s3] sm:$0xf]
    %v93 = vld [vmem:[%s3 + $0x4] sm:$0xf]
    %v96 = vunpack.c.l.b16 %v92
    %v97 = vunpack.c.l.b16 %v93
    %v98 = vpack.c.b16 %v97, %v96
    %vm100 = vcmask 130048
    %v102 = vsel %vm100, %v87, 0
    %104 = vmatprep.subr.bf16.mxu0 0
    %105 = vmatpush1.bf16.msra.mxu0 %v98
    %106 = vmatprep.subr.bf16.mxu0 0
    %107 = vmatpush1.bf16.msra.mxu0 0
    %108 = vmatprep.subr.bf16.mxu0 0
    %109 = vmatpush1.bf16.msra.mxu0 0
    %110 = vmatprep.subr.bf16.mxu0 0
    %111 = vmatpush1.bf16.msra.mxu0 0
    %112 = vmatprep.subr.bf16.mxu0 0
    %113 = vmatpush1.bf16.msra.mxu0 0
    %114 = vmatprep.subr.bf16.mxu0 0
    %115 = vmatpush1.bf16.msra.mxu0 0
    %116 = vmatprep.subr.bf16.mxu0 0
    %117 = vmatpush1.bf16.msra.mxu0 0
    %118 = vmatprep.subr.bf16.mxu0 0
    %119 = vmatpush1.bf16.msra.mxu0 0
    %120 = vmatprep.subr.bf16.mxu0 0
    %121 = vmatpush1.bf16.msra.mxu0 0
    %122 = vmatprep.subr.bf16.mxu0 0
    %123 = vmatpush1.bf16.msra.mxu0 0
    %124 = vmatprep.subr.bf16.mxu0 0
    %125 = vmatpush1.bf16.msra.mxu0 0
    %126 = vmatprep.subr.bf16.mxu0 0
    %127 = vmatpush1.bf16.msra.mxu0 0
    %128 = vmatprep.subr.bf16.mxu0 0
    %129 = vmatpush1.bf16.msra.mxu0 0
    %130 = vmatprep.subr.bf16.mxu0 0
    %131 = vmatpush1.bf16.msra.mxu0 0
    %132 = vmatprep.subr.bf16.mxu0 0
    %133 = vmatpush1.bf16.msra.mxu0 0
    %134 = vmatprep.subr.bf16.mxu0 0
    %135 = vmatpush1.bf16.msra.mxu0 0
    %136 = vmatprep.mubr.bf16.mxu0 0
    %137 = vmatmul.mubr.bf16.gmra.mrb[0].mxu0 %v102
    %v138 = vpop.f32.mrb[0].mxu0
    %v139 = vadd.f32 0.0, %v138
    %v140 = vpop.f32.mrb[0].mxu0
    %v141 = vpop.f32.mrb[0].mxu0
    %v142 = vpop.f32.mrb[0].mxu0
    %143 = vdwg.mxu0
    %v148 = vunpack.c.l.b16 %v88
    %v149 = vunpack.c.l.b16 %v89
    %v150 = vunpack.c.l.b16 %v90
    %v151 = vunpack.c.l.b16 %v91
    %v152 = vpack.c.b16 %v149, %v148
    %v153 = vpack.c.b16 %v151, %v150
    %vm156 = vcmask 261120
    %v158 = vsel %vm156, %v85, 0
    %160 = vmatprep.subr.bf16.mxu0 0
    %161 = vmatpush1.bf16.msra.mxu0 %v152
    %162 = vmatprep.subr.bf16.mxu0 0
    %163 = vmatpush1.bf16.msra.mxu0 %v153
    %164 = vmatprep.subr.bf16.mxu0 0
    %165 = vmatpush1.bf16.msra.mxu0 0
    %166 = vmatprep.subr.bf16.mxu0 0
    %167 = vmatpush1.bf16.msra.mxu0 0
    %168 = vmatprep.subr.bf16.mxu0 0
    %169 = vmatpush1.bf16.msra.mxu0 0
    %170 = vmatprep.subr.bf16.mxu0 0
    %171 = vmatpush1.bf16.msra.mxu0 0
    %172 = vmatprep.subr.bf16.mxu0 0
    %173 = vmatpush1.bf16.msra.mxu0 0
    %174 = vmatprep.subr.bf16.mxu0 0
    %175 = vmatpush1.bf16.msra.mxu0 0
    %176 = vmatprep.subr.bf16.mxu0 0
    %177 = vmatpush1.bf16.msra.mxu0 0
    %178 = vmatprep.subr.bf16.mxu0 0
    %179 = vmatpush1.bf16.msra.mxu0 0
    %180 = vmatprep.subr.bf16.mxu0 0
    %181 = vmatpush1.bf16.msra.mxu0 0
    %182 = vmatprep.subr.bf16.mxu0 0
    %183 = vmatpush1.bf16.msra.mxu0 0
    %184 = vmatprep.subr.bf16.mxu0 0
    %185 = vmatpush1.bf16.msra.mxu0 0
    %186 = vmatprep.subr.bf16.mxu0 0
    %187 = vmatpush1.bf16.msra.mxu0 0
    %188 = vmatprep.subr.bf16.mxu0 0
    %189 = vmatpush1.bf16.msra.mxu0 0
    %190 = vmatprep.subr.bf16.mxu0 0
    %191 = vmatpush1.bf16.msra.mxu0 0
    %192 = vmatprep.mubr.bf16.mxu0 0
    %193 = vmatmul.mubr.bf16.gmra.mrb[0].mxu0 %v158
    %v194 = vpop.f32.mrb[0].mxu0
    %v195 = vadd.f32 %v139, %v194
    %v196 = vpop.f32.mrb[0].mxu0
    %v197 = vpop.f32.mrb[0].mxu0
    %v198 = vpop.f32.mrb[0].mxu0
    %199 = vdwg.mxu0
    %v200 = vld [vmem:[%s4] sm:$0x1]
    %v201 = vlaneseq
    %v202 = vshrl.u32 %v201, 7
    %v203 = vsub.s32 0, %v202
    %v204 = vrot.slane %v200, %v203
    %v205 = vadd.f32 %v195, %v204
    %v206 = vmax.f32 %v205, 0.0
    %v207 = vpack.c.bf16 %v206, %v206
    %v208 = vld [vmem:[#allocation7] sm:$0xf]
    %v209 = vld [vmem:[#allocation7 + $0x4] sm:$0xf]
    %v210 = vld [vmem:[#allocation7 + $0x8] sm:$0xf]
    %v211 = vld [vmem:[#allocation7 + $0xc] sm:$0xf]
    %v212 = vld [vmem:[#allocation7 + $0x10] sm:$0xf]
    %v213 = vld [vmem:[#allocation7 + $0x14] sm:$0xf]
    %v214 = vld [vmem:[#allocation7 + $0x18] sm:$0xf]
    %v215 = vld [vmem:[#allocation7 + $0x1c] sm:$0xf]
    %v216 = vld [vmem:[#allocation7 + $0x20] sm:$0xf]
    %v217 = vld [vmem:[#allocation7 + $0x24] sm:$0xf]
    %v218 = vld [vmem:[#allocation7 + $0x28] sm:$0xf]
    %v219 = vld [vmem:[#allocation7 + $0x2c] sm:$0xf]
    %v220 = vld [vmem:[#allocation7 + $0x30] sm:$0xf]
    %v221 = vld [vmem:[#allocation7 + $0x34] sm:$0xf]
    %v222 = vld [vmem:[#allocation7 + $0x38] sm:$0xf]
    %v223 = vld [vmem:[#allocation7 + $0x3c] sm:$0xf]
    %v224 = vld [vmem:[%s4 + $0x1] sm:$0x1]
    %v225 = vlaneseq
    %v226 = vshrl.u32 %v225, 7
    %v227 = vsub.s32 0, %v226
    %v228 = vrot.slane %v224, %v227
    %v245 = vunpack.c.l.b16 %v208
    %v246 = vunpack.c.l.b16 %v209
    %v247 = vunpack.c.l.b16 %v210
    %v248 = vunpack.c.l.b16 %v211
    %v249 = vunpack.c.l.b16 %v212
    %v250 = vunpack.c.l.b16 %v213
    %v251 = vunpack.c.l.b16 %v214
    %v252 = vunpack.c.l.b16 %v215
    %v253 = vunpack.c.l.b16 %v216
    %v254 = vunpack.c.l.b16 %v217
    %v255 = vunpack.c.l.b16 %v218
    %v256 = vunpack.c.l.b16 %v219
    %v257 = vunpack.c.l.b16 %v220
    %v258 = vunpack.c.l.b16 %v221
    %v259 = vunpack.c.l.b16 %v222
    %v260 = vunpack.c.l.b16 %v223
    %v261 = vpack.c.b16 %v246, %v245
    %v262 = vpack.c.b16 %v248, %v247
    %v263 = vpack.c.b16 %v250, %v249
    %v264 = vpack.c.b16 %v252, %v251
    %v265 = vpack.c.b16 %v254, %v253
    %v266 = vpack.c.b16 %v256, %v255
    %v267 = vpack.c.b16 %v258, %v257
    %v268 = vpack.c.b16 %v260, %v259
    %277 = vmatprep.subr.bf16.mxu0 0
    %278 = vmatpush1.bf16.msra.mxu0 %v261
    %279 = vmatprep.subr.bf16.mxu0 0
    %280 = vmatpush1.bf16.msra.mxu0 %v262
    %281 = vmatprep.subr.bf16.mxu0 0
    %282 = vmatpush1.bf16.msra.mxu0 %v263
    %283 = vmatprep.subr.bf16.mxu0 0
    %284 = vmatpush1.bf16.msra.mxu0 %v264
    %285 = vmatprep.subr.bf16.mxu0 0
    %286 = vmatpush1.bf16.msra.mxu0 %v265
    %287 = vmatprep.subr.bf16.mxu0 0
    %288 = vmatpush1.bf16.msra.mxu0 %v266
    %289 = vmatprep.subr.bf16.mxu0 0
    %290 = vmatpush1.bf16.msra.mxu0 %v267
    %291 = vmatprep.subr.bf16.mxu0 0
    %292 = vmatpush1.bf16.msra.mxu0 %v268
    %293 = vmatprep.subr.bf16.mxu0 0
    %294 = vmatpush1.bf16.msra.mxu0 0
    %295 = vmatprep.subr.bf16.mxu0 0
    %296 = vmatpush1.bf16.msra.mxu0 0
    %297 = vmatprep.subr.bf16.mxu0 0
    %298 = vmatpush1.bf16.msra.mxu0 0
    %299 = vmatprep.subr.bf16.mxu0 0
    %300 = vmatpush1.bf16.msra.mxu0 0
    %301 = vmatprep.subr.bf16.mxu0 0
    %302 = vmatpush1.bf16.msra.mxu0 0
    %303 = vmatprep.subr.bf16.mxu0 0
    %304 = vmatpush1.bf16.msra.mxu0 0
    %305 = vmatprep.subr.bf16.mxu0 0
    %306 = vmatpush1.bf16.msra.mxu0 0
    %307 = vmatprep.subr.bf16.mxu0 0
    %308 = vmatpush1.bf16.msra.mxu0 0
    %309 = vmatprep.mubr.bf16.mxu0 0
    %310 = vmatmul.mubr.bf16.gmra.mrb[0].mxu0 %v207
    %v311 = vpop.f32.mrb[0].mxu0
    %v312 = vadd.f32 %v228, %v311
    %v313 = vpop.f32.mrb[0].mxu0
    %v314 = vpop.f32.mrb[0].mxu0
    %v315 = vpop.f32.mrb[0].mxu0
    %316 = vdwg.mxu0
    %v317 = vmax.f32 %v312, 0.0
    %v318 = vpack.c.bf16 %v317, %v317
    %v319 = vld [vmem:[#allocation8] sm:$0xf]
    %v320 = vld [vmem:[#allocation8 + $0x4] sm:$0xf]
    %v321 = vld [vmem:[#allocation8 + $0x8] sm:$0xf]
    %v322 = vld [vmem:[#allocation8 + $0xc] sm:$0xf]
    %v323 = vld [vmem:[#allocation8 + $0x10] sm:$0xf]
    %v324 = vld [vmem:[#allocation8 + $0x14] sm:$0xf]
    %v325 = vld [vmem:[#allocation8 + $0x18] sm:$0xf]
    %v326 = vld [vmem:[#allocation8 + $0x1c] sm:$0xf]
    %v327 = vld [vmem:[#allocation8 + $0x20] sm:$0xf]
    %v328 = vld [vmem:[#allocation8 + $0x24] sm:$0xf]
    %v329 = vld [vmem:[#allocation8 + $0x28] sm:$0xf]
    %v330 = vld [vmem:[#allocation8 + $0x2c] sm:$0xf]
    %v331 = vld [vmem:[#allocation8 + $0x30] sm:$0xf]
    %v332 = vld [vmem:[#allocation8 + $0x34] sm:$0xf]
    %v333 = vld [vmem:[#allocation8 + $0x38] sm:$0xf]
    %v334 = vld [vmem:[#allocation8 + $0x3c] sm:$0xf]
    %v335 = vld [vmem:[%s7] sm:$0x1]
    %v337 = vlaneseq
    %v338 = vshrl.u32 %v337, 7
    %v339 = vsub.s32 0, %v338
    %v340 = vrot.slane %v335, %v339
    %v358 = vunpack.c.l.b16 %v319
    %v359 = vunpack.c.l.b16 %v320
    %v360 = vunpack.c.l.b16 %v321
    %v361 = vunpack.c.l.b16 %v322
    %v362 = vunpack.c.l.b16 %v323
    %v363 = vunpack.c.l.b16 %v324
    %v364 = vunpack.c.l.b16 %v325
    %v365 = vunpack.c.l.b16 %v326
    %v366 = vunpack.c.l.b16 %v327
    %v367 = vunpack.c.l.b16 %v328
    %v368 = vunpack.c.l.b16 %v329
    %v369 = vunpack.c.l.b16 %v330
    %v370 = vunpack.c.l.b16 %v331
    %v371 = vunpack.c.l.b16 %v332
    %v372 = vunpack.c.l.b16 %v333
    %v373 = vunpack.c.l.b16 %v334
    %v374 = vpack.c.b16 %v359, %v358
    %v375 = vpack.c.b16 %v361, %v360
    %v376 = vpack.c.b16 %v363, %v362
    %v377 = vpack.c.b16 %v365, %v364
    %v378 = vpack.c.b16 %v367, %v366
    %v379 = vpack.c.b16 %v369, %v368
    %v380 = vpack.c.b16 %v371, %v370
    %v381 = vpack.c.b16 %v373, %v372
    %390 = vmatprep.subr.bf16.mxu0 0
    %391 = vmatpush1.bf16.msra.mxu0 %v374
    %392 = vmatprep.subr.bf16.mxu0 0
    %393 = vmatpush1.bf16.msra.mxu0 %v375
    %394 = vmatprep.subr.bf16.mxu0 0
    %395 = vmatpush1.bf16.msra.mxu0 %v376
    %396 = vmatprep.subr.bf16.mxu0 0
    %397 = vmatpush1.bf16.msra.mxu0 %v377
    %398 = vmatprep.subr.bf16.mxu0 0
    %399 = vmatpush1.bf16.msra.mxu0 %v378
    %400 = vmatprep.subr.bf16.mxu0 0
    %401 = vmatpush1.bf16.msra.mxu0 %v379
    %402 = vmatprep.subr.bf16.mxu0 0
    %403 = vmatpush1.bf16.msra.mxu0 %v380
    %404 = vmatprep.subr.bf16.mxu0 0
    %405 = vmatpush1.bf16.msra.mxu0 %v381
    %406 = vmatprep.subr.bf16.mxu0 0
    %407 = vmatpush1.bf16.msra.mxu0 0
    %408 = vmatprep.subr.bf16.mxu0 0
    %409 = vmatpush1.bf16.msra.mxu0 0
    %410 = vmatprep.subr.bf16.mxu0 0
    %411 = vmatpush1.bf16.msra.mxu0 0
    %412 = vmatprep.subr.bf16.mxu0 0
    %413 = vmatpush1.bf16.msra.mxu0 0
    %414 = vmatprep.subr.bf16.mxu0 0
    %415 = vmatpush1.bf16.msra.mxu0 0
    %416 = vmatprep.subr.bf16.mxu0 0
    %417 = vmatpush1.bf16.msra.mxu0 0
    %418 = vmatprep.subr.bf16.mxu0 0
    %419 = vmatpush1.bf16.msra.mxu0 0
    %420 = vmatprep.subr.bf16.mxu0 0
    %421 = vmatpush1.bf16.msra.mxu0 0
    %422 = vmatprep.mubr.bf16.mxu0 0
    %423 = vmatmul.mubr.bf16.gmra.mrb[0].mxu0 %v318
    %v424 = vpop.f32.mrb[0].mxu0
    %v425 = vadd.f32 %v340, %v424
    %v426 = vpop.f32.mrb[0].mxu0
    %v427 = vpop.f32.mrb[0].mxu0
    %v428 = vpop.f32.mrb[0].mxu0
    %429 = vdwg.mxu0
    %430 = vst [vmem:[#allocation10] sm:$0x3] %v425
    // Predicated region
    $region50: #{tpu_custom_call.1} parent=1 // pred_check
      _
    $region51: #{tpu_custom_call.1} parent=1 // pred_check_branch
      %432 = sbr.rel (0) target = $region53
    $region52: #{tpu_custom_call.1} parent=1 // pred_region
      %s434 = ssub.s32 32, 32
      %435 = vsyncadd [#allocation4], %s434
      %s437 = sshll.u32 [#allocation10], 4
      %s438 = int_to_ptr.vmem [resolvable:$true] %s437
      %440 = dma.vmem_to_hbm [thread:$0]  %s438, 32, %s8, [#allocation4]
    $region53: #{tpu_custom_call.1} parent=1 // pred_fallthru
      _
    // Predicated region
    $region54: #{tpu_custom_call.1} parent=1 // pred_check
      _
    $region55: #{tpu_custom_call.1} parent=1 // pred_check_branch
      %442 = sbr.rel (0) target = $region57
    $region56: #{tpu_custom_call.1} parent=1 // pred_region
      %443 = dma.done [#allocation4], 32
    $region57: #{tpu_custom_call.1} parent=1 // pred_fallthru
      _
    %444 = vsyncpa [#allocation3], 1
    %445 = vsyncpa [#allocation6], 1
    %446 = vsyncpa [#allocation9], 1
    %447 = vsyncpa [#allocation4], 1

</llo_original>
